<compile_context>
chip_gen: v7x
topology: tpu7x:2x2x1
jax: 0.10.0
libtpu: 0.0.40
codegen_flags: <defaults>
</compile_context>

<pallas_src>
import jax
import jax.numpy as jnp
from jax.experimental import pallas as pl
from jax.experimental.pallas import tpu as pltpu


# --------------------------------------------------------------------------------------
# Fused single-kernel path (grid over batch)
# --------------------------------------------------------------------------------------
def _make_fused_kernel(M):
    def kernel(*refs):
        f_refs = refs[:M]
        wfc_ref, bfc_ref, wh_ref, bh_ref, out_ref = refs[M:M + 5]
        C, HW = f_refs[0].shape
        inv_hw = 1.0 / float(HW)

        # ---- head + spatial reduction (f32 accumulation) -> fea_s (C, 1) ----
        s = f_refs[0][...].astype(jnp.float32)
        for m in range(1, M):
            s = s + f_refs[m][...].astype(jnp.float32)
        fea_s = jnp.sum(s, axis=1, keepdims=True) * inv_hw              # (C, 1)

        # ---- squeeze FC + fused excitation matmul (column layout, tiny MXU dots) ----
        z = jnp.dot(wfc_ref[...], fea_s,
                    preferred_element_type=jnp.float32) + bfc_ref[...]   # (d, 1)
        logits = jnp.dot(wh_ref[...], z,
                         preferred_element_type=jnp.float32) + bh_ref[...]  # (M*C, 1)

        # ---- head-axis softmax (per channel) ----
        heads = [logits[m * C:(m + 1) * C, :] for m in range(M)]         # each (C, 1)
        mx = heads[0]
        for m in range(1, M):
            mx = jnp.maximum(mx, heads[m])
        exps = [jnp.exp(h - mx) for h in heads]
        denom = exps[0]
        for m in range(1, M):
            denom = denom + exps[m]
        inv = pl.reciprocal(denom, approx=False)                         # tiny, exact

        # ---- attention-weighted sum of the resident slabs ----
        acc = (exps[0] * inv) * f_refs[0][...].astype(jnp.float32)
        for m in range(1, M):
            acc = acc + (exps[m] * inv) * f_refs[m][...].astype(jnp.float32)
        out_ref[...] = acc.astype(out_ref.dtype)

    return kernel


# --------------------------------------------------------------------------------------
# Fallback tiling helpers (streaming 3-pass path)
# --------------------------------------------------------------------------------------
def _pick_row_tile(rows):
    """Largest multiple-of-8 divisor of `rows`, capped at 128; full dim otherwise."""
    if rows % 8 != 0:
        return rows
    for cand in (128, 64, 32, 16, 8):
        if cand <= rows and rows % cand == 0:
            return cand
    return rows


def _pick_lane_tile(lanes, row_tile, num_heads, itemsize):
    """Largest multiple-of-128 divisor of `lanes` (cap 4096) whose double-buffered
    working set (num_heads inputs + 1 output) stays within ~12 MiB; full dim otherwise.
    """
    if lanes % 128 != 0:
        # TODO(synk): cdiv grid + tail masking for large non-128-multiple spatial sizes.
        return lanes
    budget = 12 * 1024 * 1024
    for cand in (4096, 2048, 1024, 512, 256, 128):
        if cand <= lanes and lanes % cand == 0:
            if (num_heads + 1) * 2 * row_tile * cand * itemsize <= budget:
                return cand
    return 128


# --------------------------------------------------------------------------------------
# Public entry point
# --------------------------------------------------------------------------------------
def ss_forward_pallas(features, wfc, bfc, wh, bh):
    """features: list of M arrays, each (B, C, H, W).
    wfc: (d, C)  bfc: (d,)  wh: (M, C, d)  bh: (M, C)   (PyTorch nn.Linear shapes).
    Returns (B, C, H, W)."""
    M = len(features)
    B, C, H, W = features[0].shape
    HW = H * W
    d = wfc.shape[0]
    in_dtype = features[0].dtype
    itemsize = jnp.dtype(in_dtype).itemsize

    # Column-layout weight operands (f32): no transposes needed inside the kernels.
    wfc_f = wfc.astype(jnp.float32)                          # (d, C)
    bfc_col = bfc.reshape(d, 1).astype(jnp.float32)          # (d, 1)
    wh2d = wh.reshape(M * C, d).astype(jnp.float32)          # (M*C, d), row (m,c) = wh[m,c,:]
    bh_col = bh.reshape(M * C, 1).astype(jnp.float32)        # (M*C, 1)

    # ------------------------------ fused path VMEM budget ------------------------------
    slab_bytes = C * HW * itemsize
    weights_bytes = 4 * (wfc_f.size + bfc_col.size + wh2d.size + bh_col.size)
    fused_bytes = 2 * (M + 1) * slab_bytes + weights_bytes   # double-buffered ins + out
    FUSED_LIMIT = 28 * 1024 * 1024                           # headroom under 32 MiB scoped

    if fused_bytes <= FUSED_LIMIT:
        feats3d = [f.reshape(B, C, HW) for f in features]    # free reshape, lane = spatial
        vmem_limit = int(min(max(fused_bytes + (2 << 20), 16 << 20), 32 << 20))
        out3d = pl.pallas_call(
            _make_fused_kernel(M),
            out_shape=jax.ShapeDtypeStruct((B, C, HW), in_dtype),
            grid_spec=pltpu.PrefetchScalarGridSpec(
                num_scalar_prefetch=0,
                grid=(B,),
                in_specs=[pl.BlockSpec((None, C, HW), lambda b: (b, 0, 0))] * M
                         + [pl.BlockSpec((d, C), lambda b: (0, 0)),
                            pl.BlockSpec((d, 1), lambda b: (0, 0)),
                            pl.BlockSpec((M * C, d), lambda b: (0, 0)),
                            pl.BlockSpec((M * C, 1), lambda b: (0, 0))],
                out_specs=pl.BlockSpec((None, C, HW), lambda b: (b, 0, 0)),
            ),
            compiler_params=pltpu.CompilerParams(
                dimension_semantics=("parallel",),
                vmem_limit_bytes=vmem_limit),
        )(*feats3d, wfc_f, bfc_col, wh2d, bh_col)
        return out3d.reshape(B, C, H, W)

    # ================= fallback: streaming 3-pass structure (large slabs) =================
    R = B * C
    feats2d = [f.reshape(R, HW) for f in features]
    RT = _pick_row_tile(R)
    LT = _pick_lane_tile(HW, RT, M, itemsize)
    grid_rows = R // RT
    grid_lanes = HW // LT

    # ---- pass 1: spatial + head reduction -> (B*C, 1) sums ----
    def reduce_kernel(*refs):
        f_refs, sum_ref = refs[:-1], refs[-1]
        s = f_refs[0][...].astype(jnp.float32)
        for m in range(1, M):
            s = s + f_refs[m][...].astype(jnp.float32)
        part = jnp.sum(s, axis=1, keepdims=True)              # (RT, 1)
        j = pl.program_id(1)

        @pl.when(j == 0)
        def _():
            sum_ref[...] = part

        @pl.when(j > 0)
        def _():
            sum_ref[...] += part

    fea_sum = pl.pallas_call(
        reduce_kernel,
        out_shape=jax.ShapeDtypeStruct((R, 1), jnp.float32),
        grid_spec=pltpu.PrefetchScalarGridSpec(
            num_scalar_prefetch=0,
            grid=(grid_rows, grid_lanes),
            in_specs=[pl.BlockSpec((RT, LT), lambda i, j: (i, j))] * M,
            out_specs=pl.BlockSpec((RT, 1), lambda i, j: (i, 0)),
        ),
        compiler_params=pltpu.CompilerParams(
            dimension_semantics=("parallel", "arbitrary")),
    )(*feats2d)

    # ---- pass 2: tiny squeeze / excitation / softmax -> att (M, B, C) ----
    inv_hw = 1.0 / float(HW)
    wfc_t = wfc_f.T                                            # (C, d)
    bfc_row = bfc.reshape(1, d).astype(jnp.float32)            # (1, d)
    wh_flat = jnp.transpose(wh, (2, 0, 1)).reshape(d, M * C).astype(jnp.float32)
    bh_row = bh.reshape(1, M * C).astype(jnp.float32)

    def fc_softmax_kernel(s_ref, wfc_ref, bfc_ref, wh_ref, bh_ref, att_ref):
        fea_s = s_ref[...] * inv_hw                                        # (B, C)
        z = jnp.dot(fea_s, wfc_ref[...],
                    preferred_element_type=jnp.float32) + bfc_ref[...]     # (B, d)
        logits = jnp.dot(z, wh_ref[...],
                         preferred_element_type=jnp.float32) + bh_ref[...]  # (B, M*C)
        heads = [logits[:, m * C:(m + 1) * C] for m in range(M)]
        mx = heads[0]
        for m in range(1, M):
            mx = jnp.maximum(mx, heads[m])
        exps = [jnp.exp(h - mx) for h in heads]
        denom = exps[0]
        for m in range(1, M):
            denom = denom + exps[m]
        inv = pl.reciprocal(denom, approx=False)
        for m in range(M):
            att_ref[m] = exps[m] * inv

    att = pl.pallas_call(
        fc_softmax_kernel,
        out_shape=jax.ShapeDtypeStruct((M, B, C), jnp.float32),
        in_specs=[pl.BlockSpec(memory_space=pltpu.MemorySpace.VMEM)] * 5,
        out_specs=pl.BlockSpec(memory_space=pltpu.MemorySpace.VMEM),
    )(fea_sum.reshape(B, C), wfc_t, bfc_row, wh_flat, bh_row)

    att3 = att.reshape(M, R, 1)   # one scalar weight per (head, b*c) row

    # ---- pass 3: attention-weighted sum over heads ----
    def wsum_kernel(att_ref, *refs):
        f_refs, out_ref = refs[:-1], refs[-1]
        acc = att_ref[0] * f_refs[0][...].astype(jnp.float32)
        for m in range(1, M):
            acc = acc + att_ref[m] * f_refs[m][...].astype(jnp.float32)
        out_ref[...] = acc.astype(out_ref.dtype)

    out2d = pl.pallas_call(
        wsum_kernel,
        out_shape=jax.ShapeDtypeStruct((R, HW), in_dtype),
        grid_spec=pltpu.PrefetchScalarGridSpec(
            num_scalar_prefetch=0,
            grid=(grid_rows, grid_lanes),
            in_specs=[pl.BlockSpec((M, RT, 1), lambda i, j: (0, i, 0))]
                     + [pl.BlockSpec((RT, LT), lambda i, j: (i, j))] * M,
            out_specs=pl.BlockSpec((RT, LT), lambda i, j: (i, j)),
        ),
        compiler_params=pltpu.CompilerParams(
            dimension_semantics=("parallel", "parallel")),
    )(att3, *feats2d)

    return out2d.reshape(B, C, H, W)


# --------------------------------------------------------------------------------------
# Plain-JAX reference mirroring the PyTorch forward
# --------------------------------------------------------------------------------------
def ss_forward_ref(features, wfc, bfc, wh, bh):
    M = len(features)
    feas = jnp.stack(features, axis=1)                        # (B, M, C, H, W)
    fea_U = feas.sum(axis=1)                                  # (B, C, H, W)
    fea_s = fea_U.mean(axis=-1).mean(axis=-1)                 # (B, C)
    fea_z = fea_s @ wfc.T + bfc                               # (B, d)
    vecs = jnp.stack([fea_z @ wh[m].T + bh[m] for m in range(M)], axis=1)
    att = jax.nn.softmax(vecs, axis=1)                        # (B, M, C)
    return (feas * att[..., None, None]).sum(axis=1)          # (B, C, H, W)


if __name__ == "__main__":
    # SS(M=2, ch_in=32, r=4)  ->  d = 8
    M, B, C, H, W, r = 2, 2, 32, 8, 8, 4
    d = C // r

    key = jax.random.PRNGKey(0)
    keys = jax.random.split(key, 4 + M)

    # deterministic synthetic parameters (PyTorch Linear shapes: W is (out, in))
    wfc = jax.random.normal(keys[0], (d, C), jnp.float32) * 0.1
    bfc = jax.random.normal(keys[1], (d,), jnp.float32) * 0.1
    wh = jax.random.normal(keys[2], (M, C, d), jnp.float32) * 0.1
    bh = jax.random.normal(keys[3], (M, C), jnp.float32) * 0.1

    # M input feature maps, NCHW
    features = [
        jax.random.normal(keys[4 + m], (B, C, H, W), jnp.float32)
        for m in range(M)
    ]

    fwd = jax.jit(ss_forward_pallas)
    out = jax.block_until_ready(fwd(features, wfc, bfc, wh, bh))

    ref = ss_forward_ref(features, wfc, bfc, wh, bh)
    assert out.shape == (B, C, H, W)
    assert jnp.allclose(out, ref, atol=1e-4, rtol=1e-4), "mismatch vs reference"

    print("KERNEL_OK")
</pallas_src>

<mosaic_0001>
module attributes {stable_mosaic.version = 11 : i64} {
  func.func @kernel(%arg0: i32, %arg1: memref<1x32x64xf32, #tpu.memory_space<vmem>>, %arg2: memref<1x32x64xf32, #tpu.memory_space<vmem>>, %arg3: memref<8x32xf32, #tpu.memory_space<vmem>>, %arg4: memref<8x1xf32, #tpu.memory_space<vmem>>, %arg5: memref<64x8xf32, #tpu.memory_space<vmem>>, %arg6: memref<64x1xf32, #tpu.memory_space<vmem>>, %arg7: memref<1x32x64xf32, #tpu.memory_space<vmem>>) attributes {dimension_semantics = [#tpu.dimension_semantics<parallel>], iteration_bounds = array<i64: 2>, scalar_prefetch = 0 : i64, scratch_operands = 0 : i64, tpu.core_type = #tpu.core_type<tc>, window_params = [{transform_indices = @transform_0, window_bounds = array<i64: 1, 32, 64>}, {transform_indices = @transform_1, window_bounds = array<i64: 1, 32, 64>}, {pipeline_mode = #tpu.pipeline_mode<synchronous>, transform_indices = @transform_2, window_bounds = array<i64: 8, 32>}, {pipeline_mode = #tpu.pipeline_mode<synchronous>, transform_indices = @transform_3, window_bounds = array<i64: 8, 1>}, {pipeline_mode = #tpu.pipeline_mode<synchronous>, transform_indices = @transform_4, window_bounds = array<i64: 64, 8>}, {pipeline_mode = #tpu.pipeline_mode<synchronous>, transform_indices = @transform_5, window_bounds = array<i64: 64, 1>}, {transform_indices = @transform_6, window_bounds = array<i64: 1, 32, 64>}]} {
    %c0 = arith.constant 0 : index
    %c0_0 = arith.constant 0 : index
    %c0_1 = arith.constant 0 : index
    %0 = vector.load %arg1[%c0, %c0_0, %c0_1] : memref<1x32x64xf32, #tpu.memory_space<vmem>>, vector<1x32x64xf32>
    %1 = vector.shape_cast %0 : vector<1x32x64xf32> to vector<32x64xf32>
    %c0_2 = arith.constant 0 : index
    %c0_3 = arith.constant 0 : index
    %c0_4 = arith.constant 0 : index
    %2 = vector.load %arg2[%c0_2, %c0_3, %c0_4] : memref<1x32x64xf32, #tpu.memory_space<vmem>>, vector<1x32x64xf32>
    %3 = vector.shape_cast %2 : vector<1x32x64xf32> to vector<32x64xf32>
    %4 = arith.addf %1, %3 : vector<32x64xf32>
    %cst = arith.constant dense<0.000000e+00> : vector<32xf32>
    %5 = vector.multi_reduction <add>, %4, %cst [1] : vector<32x64xf32> to vector<32xf32>
    %6 = vector.shape_cast %5 : vector<32xf32> to vector<32x1xf32>
    %cst_5 = arith.constant 1.562500e-02 : f32
    %7 = vector.broadcast %cst_5 : f32 to vector<32x1xf32>
    %8 = arith.mulf %6, %7 : vector<32x1xf32>
    %c0_6 = arith.constant 0 : index
    %c0_7 = arith.constant 0 : index
    %9 = vector.load %arg3[%c0_6, %c0_7] : memref<8x32xf32, #tpu.memory_space<vmem>>, vector<8x32xf32>
    %cst_8 = arith.constant dense<0.000000e+00> : vector<8x1xf32>
    %10 = tpu.matmul %9, %8, %cst_8 {dimension_numbers = #tpu.dot_dimension_numbers<[1], [0], [0], [1], [0, 0, 1, 1], [], []>} : vector<8x32xf32>, vector<32x1xf32>, vector<8x1xf32> -> vector<8x1xf32>
    %c0_9 = arith.constant 0 : index
    %c0_10 = arith.constant 0 : index
    %11 = vector.load %arg4[%c0_9, %c0_10] : memref<8x1xf32, #tpu.memory_space<vmem>>, vector<8x1xf32>
    %12 = arith.addf %10, %11 : vector<8x1xf32>
    %c0_11 = arith.constant 0 : index
    %c0_12 = arith.constant 0 : index
    %13 = vector.load %arg5[%c0_11, %c0_12] : memref<64x8xf32, #tpu.memory_space<vmem>>, vector<64x8xf32>
    %cst_13 = arith.constant dense<0.000000e+00> : vector<64x1xf32>
    %14 = tpu.matmul %13, %12, %cst_13 {dimension_numbers = #tpu.dot_dimension_numbers<[1], [0], [0], [1], [0, 0, 1, 1], [], []>} : vector<64x8xf32>, vector<8x1xf32>, vector<64x1xf32> -> vector<64x1xf32>
    %c0_14 = arith.constant 0 : index
    %c0_15 = arith.constant 0 : index
    %15 = vector.load %arg6[%c0_14, %c0_15] : memref<64x1xf32, #tpu.memory_space<vmem>>, vector<64x1xf32>
    %16 = arith.addf %14, %15 : vector<64x1xf32>
    %17 = vector.extract_strided_slice %16 {offsets = [0, 0], sizes = [32, 1], strides = [1, 1]} : vector<64x1xf32> to vector<32x1xf32>
    %18 = vector.extract_strided_slice %16 {offsets = [32, 0], sizes = [32, 1], strides = [1, 1]} : vector<64x1xf32> to vector<32x1xf32>
    %19 = arith.maximumf %17, %18 : vector<32x1xf32>
    %20 = arith.subf %17, %19 : vector<32x1xf32>
    %21 = math.exp %20 : vector<32x1xf32>
    %22 = arith.subf %18, %19 : vector<32x1xf32>
    %23 = math.exp %22 : vector<32x1xf32>
    %24 = arith.addf %21, %23 : vector<32x1xf32>
    %25 = tpu.reciprocal %24 : vector<32x1xf32> -> vector<32x1xf32>
    %26 = arith.mulf %21, %25 : vector<32x1xf32>
    %c0_16 = arith.constant 0 : index
    %c0_17 = arith.constant 0 : index
    %c0_18 = arith.constant 0 : index
    %27 = vector.load %arg1[%c0_16, %c0_17, %c0_18] : memref<1x32x64xf32, #tpu.memory_space<vmem>>, vector<1x32x64xf32>
    %28 = vector.shape_cast %27 : vector<1x32x64xf32> to vector<32x64xf32>
    %29 = vector.broadcast %26 : vector<32x1xf32> to vector<32x64xf32>
    %30 = arith.mulf %29, %28 : vector<32x64xf32>
    %31 = arith.mulf %23, %25 : vector<32x1xf32>
    %c0_19 = arith.constant 0 : index
    %c0_20 = arith.constant 0 : index
    %c0_21 = arith.constant 0 : index
    %32 = vector.load %arg2[%c0_19, %c0_20, %c0_21] : memref<1x32x64xf32, #tpu.memory_space<vmem>>, vector<1x32x64xf32>
    %33 = vector.shape_cast %32 : vector<1x32x64xf32> to vector<32x64xf32>
    %34 = vector.broadcast %31 : vector<32x1xf32> to vector<32x64xf32>
    %35 = arith.mulf %34, %33 : vector<32x64xf32>
    %36 = arith.addf %30, %35 : vector<32x64xf32>
    %c0_22 = arith.constant 0 : index
    %c0_23 = arith.constant 0 : index
    %c0_24 = arith.constant 0 : index
    %37 = vector.load %arg7[%c0_22, %c0_23, %c0_24] : memref<1x32x64xf32, #tpu.memory_space<vmem>>, vector<1x32x64xf32>
    %38 = vector.shape_cast %37 : vector<1x32x64xf32> to vector<32x64xf32>
    %39 = vector.shape_cast %36 : vector<32x64xf32> to vector<1x32x64xf32>
    tpu.vector_store %arg7[%c0_22, %c0_23, %c0_24], %39 {strides = array<i32>} : memref<1x32x64xf32, #tpu.memory_space<vmem>>, vector<1x32x64xf32>,
    return
  }
  func.func @transform_0(%arg0: i32) -> (i32, i32, i32) {
    %c0_i32 = arith.constant 0 : i32
    %c0_i32_0 = arith.constant 0 : i32
    %c0_i32_1 = arith.constant 0 : i32
    return %arg0, %c0_i32, %c0_i32_0 : i32, i32, i32
  }
  func.func @transform_1(%arg0: i32) -> (i32, i32, i32) {
    %c0_i32 = arith.constant 0 : i32
    %c0_i32_0 = arith.constant 0 : i32
    %c0_i32_1 = arith.constant 0 : i32
    return %arg0, %c0_i32, %c0_i32_0 : i32, i32, i32
  }
  func.func @transform_2(%arg0: i32) -> (i32, i32) {
    %c0_i32 = arith.constant 0 : i32
    %c0_i32_0 = arith.constant 0 : i32
    %c0_i32_1 = arith.constant 0 : i32
    return %c0_i32, %c0_i32_0 : i32, i32
  }
  func.func @transform_3(%arg0: i32) -> (i32, i32) {
    %c0_i32 = arith.constant 0 : i32
    %c0_i32_0 = arith.constant 0 : i32
    %c0_i32_1 = arith.constant 0 : i32
    return %c0_i32, %c0_i32_0 : i32, i32
  }
  func.func @transform_4(%arg0: i32) -> (i32, i32) {
    %c0_i32 = arith.constant 0 : i32
    %c0_i32_0 = arith.constant 0 : i32
    %c0_i32_1 = arith.constant 0 : i32
    return %c0_i32, %c0_i32_0 : i32, i32
  }
  func.func @transform_5(%arg0: i32) -> (i32, i32) {
    %c0_i32 = arith.constant 0 : i32
    %c0_i32_0 = arith.constant 0 : i32
    %c0_i32_1 = arith.constant 0 : i32
    return %c0_i32, %c0_i32_0 : i32, i32
  }
  func.func @transform_6(%arg0: i32) -> (i32, i32, i32) {
    %c0_i32 = arith.constant 0 : i32
    %c0_i32_0 = arith.constant 0 : i32
    %c0_i32_1 = arith.constant 0 : i32
    return %arg0, %c0_i32, %c0_i32_0 : i32, i32, i32
  }
}

</mosaic_0001>

<llo_original>
// kernel: ss_forward_pallas.1
$region0: #{ss_forward_pallas.1}
  #allocation0 [shape = 'u32[]', space=smem, size = 0x4, offset = 0x4, fixed_abs, tag = 'smem constant byte address 0x4 - core index']
  #allocation1 [shape = 'u32[144,128]{1,0:T(1,128)}', space=vmem, size = 0x12000, scoped, tag = 'internal scratch']
  %s0 = inlined_call_operand.vmem [shape: f32[2,32,64], index: 0, kind: input, shape index: {}]
  %s1 = inlined_call_operand.vmem [shape: f32[2,32,64], index: 1, kind: input, shape index: {}]
  %s2 = inlined_call_operand.vmem [shape: f32[8,32], index: 2, kind: input, shape index: {}]
  %s3 = inlined_call_operand.vmem [shape: f32[8,1], index: 3, kind: input, shape index: {}]
  %s4 = inlined_call_operand.vmem [shape: f32[64,8], index: 4, kind: input, shape index: {}]
  %s5 = inlined_call_operand.vmem [shape: f32[64,1], index: 5, kind: input, shape index: {}]
  %s6 = inlined_call_operand.vmem [shape: f32[2,32,64], index: 6, kind: output, shape index: {}]
  %s7 = sld [smem:[#allocation0]]
  $region57: #{ss_forward_pallas.1} parent=0
    _
  %s9 = ssub.s32 1, %s7
  %s10 = scalar_select 0, %s9, %s7
  loop: start=0, step=1, limit=4
  $region2: #{ss_forward_pallas.1} parent=0 // loop_pre_header
    _
  $region3: #{ss_forward_pallas.1} parent=0 // loop_header
    %s12 = sphi 0, %s16
    %p13 = scmp.ge.s32.totalorder %s12, 4
    %s22 = sphi 0, %s24
    %s25 = sphi 0, %s22
    %s26 = sphi 0, %s25
    %s42 = sphi 0, %s26
    %s48 = sphi 0, %s50
    %s51 = sphi 0, %s48
    %s52 = sphi 0, %s51
    %s68 = sphi 0, %s52
    %s72 = sphi 0, %s72
    %s74 = sphi 0, %s72
    %s75 = sphi 0, %s74
    %s89 = sphi 0, %s75
    %s93 = sphi 0, %s93
    %s95 = sphi 0, %s93
    %s96 = sphi 0, %s95
    %s110 = sphi 0, %s96
    %s114 = sphi 0, %s114
    %s116 = sphi 0, %s114
    %s117 = sphi 0, %s116
    %s131 = sphi 0, %s117
    %s135 = sphi 0, %s135
    %s137 = sphi 0, %s135
    %s138 = sphi 0, %s137
    %s152 = sphi 0, %s138
    %s158 = sphi 0, %s160
    %s161 = sphi 0, %s158
    %s162 = sphi 0, %s161
    %s178 = sphi 0, %s162
  $region4: #{ss_forward_pallas.1} parent=0 // loop_header_branch
    %15 = sbr.rel (%p13) target = $region8
  $region5: #{ss_forward_pallas.1} parent=0 // loop_body
    %s17 = ssub.s32 %s12, 1
    %s18 = ssub.s32 %s12, 2
    %s19 = sadd.s32 %s12, 1
    %s20 = ssub.s32 %s12, %s19
    %p21 = scmp.eq.s32.totalorder %s20, 0
    %s23 = sadd.s32 %s22, 1
    %s24 = scalar_select %p21, %s22, %s23
    %p27 = pneg %p21
    %p28 = scmp.eq.s32.totalorder %s12, 1
    %p29 = por %p27, %p28
    %p30 = scmp.ne.s32.totalorder %s22, %s25
    %p31 = scmp.eq.s32.totalorder %s12, 0
    %p32 = por %p30, %p31
    %p33 = scmp.ne.s32.totalorder %s22, %s25
    %p34 = scmp.eq.s32.totalorder %s17, 1
    %p35 = por %p33, %p34
    %p36 = scmp.ne.s32.totalorder %s25, %s26
    %p37 = scmp.eq.s32.totalorder %s17, 0
    %p38 = por %p36, %p37
    %p39 = scmp.ne.s32.totalorder %s25, %s26
    %p40 = scmp.eq.s32.totalorder %s18, 1
    %p41 = por %p39, %p40
    %p43 = scmp.ne.s32.totalorder %s26, %s42
    %p44 = scmp.eq.s32.totalorder %s18, 0
    %p45 = por %p43, %p44
    %s46 = ssub.s32 %s12, %s19
    %p47 = scmp.eq.s32.totalorder %s46, 0
    %s49 = sadd.s32 %s48, 1
    %s50 = scalar_select %p47, %s48, %s49
    %p53 = pneg %p47
    %p54 = scmp.eq.s32.totalorder %s12, 1
    %p55 = por %p53, %p54
    %p56 = scmp.ne.s32.totalorder %s48, %s51
    %p57 = scmp.eq.s32.totalorder %s12, 0
    %p58 = por %p56, %p57
    %p59 = scmp.ne.s32.totalorder %s48, %s51
    %p60 = scmp.eq.s32.totalorder %s17, 1
    %p61 = por %p59, %p60
    %p62 = scmp.ne.s32.totalorder %s51, %s52
    %p63 = scmp.eq.s32.totalorder %s17, 0
    %p64 = por %p62, %p63
    %p65 = scmp.ne.s32.totalorder %s51, %s52
    %p66 = scmp.eq.s32.totalorder %s18, 1
    %p67 = por %p65, %p66
    %p69 = scmp.ne.s32.totalorder %s52, %s68
    %p70 = scmp.eq.s32.totalorder %s18, 0
    %p71 = por %p69, %p70
    %s73 = sadd.s32 %s72, 1
    %p76 = scmp.eq.s32.totalorder %s12, 1
    %p77 = scmp.ne.s32.totalorder %s72, %s74
    %p78 = scmp.eq.s32.totalorder %s12, 0
    %p79 = por %p77, %p78
    %p80 = scmp.ne.s32.totalorder %s72, %s74
    %p81 = scmp.eq.s32.totalorder %s17, 1
    %p82 = por %p80, %p81
    %p83 = scmp.ne.s32.totalorder %s74, %s75
    %p84 = scmp.eq.s32.totalorder %s17, 0
    %p85 = por %p83, %p84
    %p86 = scmp.ne.s32.totalorder %s74, %s75
    %p87 = scmp.eq.s32.totalorder %s18, 1
    %p88 = por %p86, %p87
    %p90 = scmp.ne.s32.totalorder %s75, %s89
    %p91 = scmp.eq.s32.totalorder %s18, 0
    %p92 = por %p90, %p91
    %s94 = sadd.s32 %s93, 1
    %p97 = scmp.eq.s32.totalorder %s12, 1
    %p98 = scmp.ne.s32.totalorder %s93, %s95
    %p99 = scmp.eq.s32.totalorder %s12, 0
    %p100 = por %p98, %p99
    %p101 = scmp.ne.s32.totalorder %s93, %s95
    %p102 = scmp.eq.s32.totalorder %s17, 1
    %p103 = por %p101, %p102
    %p104 = scmp.ne.s32.totalorder %s95, %s96
    %p105 = scmp.eq.s32.totalorder %s17, 0
    %p106 = por %p104, %p105
    %p107 = scmp.ne.s32.totalorder %s95, %s96
    %p108 = scmp.eq.s32.totalorder %s18, 1
    %p109 = por %p107, %p108
    %p111 = scmp.ne.s32.totalorder %s96, %s110
    %p112 = scmp.eq.s32.totalorder %s18, 0
    %p113 = por %p111, %p112
    %s115 = sadd.s32 %s114, 1
    %p118 = scmp.eq.s32.totalorder %s12, 1
    %p119 = scmp.ne.s32.totalorder %s114, %s116
    %p120 = scmp.eq.s32.totalorder %s12, 0
    %p121 = por %p119, %p120
    %p122 = scmp.ne.s32.totalorder %s114, %s116
    %p123 = scmp.eq.s32.totalorder %s17, 1
    %p124 = por %p122, %p123
    %p125 = scmp.ne.s32.totalorder %s116, %s117
    %p126 = scmp.eq.s32.totalorder %s17, 0
    %p127 = por %p125, %p126
    %p128 = scmp.ne.s32.totalorder %s116, %s117
    %p129 = scmp.eq.s32.totalorder %s18, 1
    %p130 = por %p128, %p129
    %p132 = scmp.ne.s32.totalorder %s117, %s131
    %p133 = scmp.eq.s32.totalorder %s18, 0
    %p134 = por %p132, %p133
    %s136 = sadd.s32 %s135, 1
    %p139 = scmp.eq.s32.totalorder %s12, 1
    %p140 = scmp.ne.s32.totalorder %s135, %s137
    %p141 = scmp.eq.s32.totalorder %s12, 0
    %p142 = por %p140, %p141
    %p143 = scmp.ne.s32.totalorder %s135, %s137
    %p144 = scmp.eq.s32.totalorder %s17, 1
    %p145 = por %p143, %p144
    %p146 = scmp.ne.s32.totalorder %s137, %s138
    %p147 = scmp.eq.s32.totalorder %s17, 0
    %p148 = por %p146, %p147
    %p149 = scmp.ne.s32.totalorder %s137, %s138
    %p150 = scmp.eq.s32.totalorder %s18, 1
    %p151 = por %p149, %p150
    %p153 = scmp.ne.s32.totalorder %s138, %s152
    %p154 = scmp.eq.s32.totalorder %s18, 0
    %p155 = por %p153, %p154
    %s156 = ssub.s32 %s12, %s19
    %p157 = scmp.eq.s32.totalorder %s156, 0
    %s159 = sadd.s32 %s158, 1
    %s160 = scalar_select %p157, %s158, %s159
    %p163 = pneg %p157
    %p164 = scmp.eq.s32.totalorder %s12, 1
    %p165 = por %p163, %p164
    %p166 = scmp.ne.s32.totalorder %s158, %s161
    %p167 = scmp.eq.s32.totalorder %s12, 0
    %p168 = por %p166, %p167
    %p169 = scmp.ne.s32.totalorder %s158, %s161
    %p170 = scmp.eq.s32.totalorder %s17, 1
    %p171 = por %p169, %p170
    %p172 = scmp.ne.s32.totalorder %s161, %s162
    %p173 = scmp.eq.s32.totalorder %s17, 0
    %p174 = por %p172, %p173
    %p175 = scmp.ne.s32.totalorder %s161, %s162
    %p176 = scmp.eq.s32.totalorder %s18, 1
    %p177 = por %p175, %p176
    %p179 = scmp.ne.s32.totalorder %s162, %s178
    %p180 = scmp.eq.s32.totalorder %s18, 0
    %p181 = por %p179, %p180
    %p182 = scmp.le.s32.totalorder 1, %s12
    %p183 = scmp.lt.s32.totalorder %s12, 3
    %p184 = pnand %p182, %p183
    %p185 = pneg %p184
    // Predicated region
    $region9: #{ss_forward_pallas.1} parent=5 // pred_check
      _
    $region10: #{ss_forward_pallas.1} parent=5 // pred_check_branch
      %187 = sbr.rel (%p184) target = $region12
    $region11: #{ss_forward_pallas.1} parent=5 // pred_region
      %s188 = ssub.s32 %s12, 1
      // Predicated region
      $region13: #{ss_forward_pallas.1} parent=11 // pred_check
        %p189 = pneg %p85
      $region14: #{ss_forward_pallas.1} parent=11 // pred_check_branch
        %191 = sbr.rel (%p189) target = $region16
      $region15: #{ss_forward_pallas.1} parent=11 // pred_region
        _
      $region16: #{ss_forward_pallas.1} parent=11 // pred_fallthru
        _
      // Predicated region
      $region17: #{ss_forward_pallas.1} parent=11 // pred_check
        %p192 = pneg %p106
      $region18: #{ss_forward_pallas.1} parent=11 // pred_check_branch
        %194 = sbr.rel (%p192) target = $region20
      $region19: #{ss_forward_pallas.1} parent=11 // pred_region
        _
      $region20: #{ss_forward_pallas.1} parent=11 // pred_fallthru
        _
      // Predicated region
      $region21: #{ss_forward_pallas.1} parent=11 // pred_check
        %p195 = pneg %p127
      $region22: #{ss_forward_pallas.1} parent=11 // pred_check_branch
        %197 = sbr.rel (%p195) target = $region24
      $region23: #{ss_forward_pallas.1} parent=11 // pred_region
        _
      $region24: #{ss_forward_pallas.1} parent=11 // pred_fallthru
        _
      // Predicated region
      $region25: #{ss_forward_pallas.1} parent=11 // pred_check
        %p198 = pneg %p148
      $region26: #{ss_forward_pallas.1} parent=11 // pred_check_branch
        %200 = sbr.rel (%p198) target = $region28
      $region27: #{ss_forward_pallas.1} parent=11 // pred_region
        _
      $region28: #{ss_forward_pallas.1} parent=11 // pred_fallthru
        _
    $region12: #{ss_forward_pallas.1} parent=5 // pred_fallthru
      _
    %p201 = scmp.lt.s32.totalorder %s12, 2
    // Predicated region
    $region29: #{ss_forward_pallas.1} parent=5 // pred_check
      %p202 = pneg %p201
    $region30: #{ss_forward_pallas.1} parent=5 // pred_check_branch
      %204 = sbr.rel (%p202) target = $region32
    $region31: #{ss_forward_pallas.1} parent=5 // pred_region
      // Predicated region
      $region33: #{ss_forward_pallas.1} parent=31 // pred_check
        %p205 = pneg %p32
      $region34: #{ss_forward_pallas.1} parent=31 // pred_check_branch
        %207 = sbr.rel (%p205) target = $region36
      $region35: #{ss_forward_pallas.1} parent=31 // pred_region
        %p208 = scmp.lt.s32.totalorder %s12, 1
        %s209 = scalar_select %p208, %s12, 1
        %s210 = smul.addr %s209, 4
        %s211 = smul.addr %s210, 8
        %s212 = scalar_lea.vmem %s0, %s211
      $region36: #{ss_forward_pallas.1} parent=31 // pred_fallthru
        _
      // Predicated region
      $region37: #{ss_forward_pallas.1} parent=31 // pred_check
        %p213 = pneg %p58
      $region38: #{ss_forward_pallas.1} parent=31 // pred_check_branch
        %215 = sbr.rel (%p213) target = $region40
      $region39: #{ss_forward_pallas.1} parent=31 // pred_region
        %p216 = scmp.lt.s32.totalorder %s12, 1
        %s217 = scalar_select %p216, %s12, 1
        %s218 = smul.addr %s217, 4
        %s219 = smul.addr %s218, 8
        %s220 = scalar_lea.vmem %s1, %s219
      $region40: #{ss_forward_pallas.1} parent=31 // pred_fallthru
        _
    $region32: #{ss_forward_pallas.1} parent=5 // pred_fallthru
      _
    %p221 = scmp.le.s32.totalorder 1, %s12
    %p222 = scmp.lt.s32.totalorder %s12, 3
    %p223 = pnand %p221, %p222
    %p224 = pneg %p223
    // Predicated region
    $region41: #{ss_forward_pallas.1} parent=5 // pred_check
      _
    $region42: #{ss_forward_pallas.1} parent=5 // pred_check_branch
      %226 = sbr.rel (%p223) target = $region44
    $region43: #{ss_forward_pallas.1} parent=5 // pred_region
      %s227 = ssub.s32 %s12, 1
      %p228 = scmp.lt.s32.totalorder %s17, 1
      %s229 = scalar_select %p228, %s17, 1
      %s230 = smul.addr %s229, 4
      %s231 = smul.addr %s230, 8
      %s232 = scalar_lea.vmem %s0, %s231
      %p233 = pneg %p38
      %p234 = pneg %p35
      %p235 = scmp.lt.s32.totalorder %s17, 1
      %s236 = scalar_select %p235, %s17, 1
      %s237 = smul.addr %s236, 4
      %s238 = smul.addr %s237, 8
      %s239 = scalar_lea.vmem %s1, %s238
      %p240 = pneg %p64
      %p241 = pneg %p61
      %p242 = pneg %p85
      %p243 = pneg %p82
      %p244 = pneg %p106
      %p245 = pneg %p103
      %p246 = pneg %p127
      %p247 = pneg %p124
      %p248 = pneg %p148
      %p249 = pneg %p145
      %p250 = pneg %p174
      %p251 = pneg %p171
      %p252 = scmp.lt.s32.totalorder %s17, 1
      %s253 = scalar_select %p252, %s17, 1
      %s254 = smul.addr %s253, 4
      %s255 = smul.addr %s254, 8
      %s256 = scalar_lea.vmem %s6, %s255
      %p257 = scmp.lt.s32.totalorder %s17, 1
      %s258 = scalar_select %p257, %s17, 1
      %s259 = smul.addr %s258, 4
      %s260 = smul.addr %s259, 8
      %s261 = scalar_lea.vmem %s0, %s260
      %p262 = scmp.lt.s32.totalorder %s17, 1
      %s263 = scalar_select %p262, %s17, 1
      %s264 = smul.addr %s263, 4
      %s265 = smul.addr %s264, 8
      %s266 = scalar_lea.vmem %s1, %s265
      %p267 = scmp.lt.s32.totalorder %s17, 1
      %s268 = scalar_select %p267, %s17, 1
      %s269 = smul.addr %s268, 4
      %s270 = smul.addr %s269, 8
      %s271 = scalar_lea.vmem %s6, %s270
      %v272 = vld [vmem:[%s261] sm:$0xff]
      %v273 = vld [vmem:[%s261 + $0x8] sm:$0xff]
      %v274 = vld [vmem:[%s261 + $0x10] sm:$0xff]
      %v275 = vld [vmem:[%s261 + $0x18] sm:$0xff]
      %v276 = vld [vmem:[%s266] sm:$0xff]
      %v277 = vld [vmem:[%s266 + $0x8] sm:$0xff]
      %v278 = vld [vmem:[%s266 + $0x10] sm:$0xff]
      %v279 = vld [vmem:[%s266 + $0x18] sm:$0xff]
      %v280 = vadd.f32 %v272, %v276
      %v281 = vadd.f32 %v273, %v277
      %v282 = vadd.f32 %v274, %v278
      %v283 = vadd.f32 %v275, %v279
      %vm284 = vcmask 523264
      %v285 = vsel %vm284, %v280, 0.0
      %286 = vadd.xlane.f32.xlu0 %v285
      %v287 = vpop.xlane.xlu0 %286
      %v288 = vsel %vm284, %v281, 0.0
      %289 = vadd.xlane.f32.xlu0 %v288
      %v290 = vpop.xlane.xlu0 %289
      %v291 = vsel %vm284, %v282, 0.0
      %292 = vadd.xlane.f32.xlu0 %v291
      %v293 = vpop.xlane.xlu0 %292
      %v294 = vsel %vm284, %v283, 0.0
      %295 = vadd.xlane.f32.xlu0 %v294
      %v296 = vpop.xlane.xlu0 %295
      %v297 = vmul.f32 %v287, 0.015625
      %v298 = vmul.f32 %v290, 0.015625
      %v299 = vmul.f32 %v293, 0.015625
      %v300 = vmul.f32 %v296, 0.015625
      %v301 = vld [vmem:[%s2] sm:$0xff]
      %v302 = vld [vmem:[%s3] sm:$0xff]
      %vm303 = vcmask 261120
      %v305 = vsel %vm303, %v301, 0
      %307 = vmatprep.subr.mxu0 0.0
      %308 = vmatpush1.msra.mxu0 %v297
      %309 = vmatprep.subr.mxu0 0.0
      %310 = vmatpush1.msra.mxu0 %v298
      %311 = vmatprep.subr.mxu0 0.0
      %312 = vmatpush1.msra.mxu0 %v299
      %313 = vmatprep.subr.mxu0 0.0
      %314 = vmatpush1.msra.mxu0 %v300
      %315 = vmatprep.subr.mxu0 0.0
      %316 = vmatpush1.msra.mxu0 0.0
      %317 = vmatprep.subr.mxu0 0.0
      %318 = vmatpush1.msra.mxu0 0.0
      %319 = vmatprep.subr.mxu0 0.0
      %320 = vmatpush1.msra.mxu0 0.0
      %321 = vmatprep.subr.mxu0 0.0
      %322 = vmatpush1.msra.mxu0 0.0
      %323 = vmatprep.subr.mxu0 0.0
      %324 = vmatpush1.msra.mxu0 0.0
      %325 = vmatprep.subr.mxu0 0.0
      %326 = vmatpush1.msra.mxu0 0.0
      %327 = vmatprep.subr.mxu0 0.0
      %328 = vmatpush1.msra.mxu0 0.0
      %329 = vmatprep.subr.mxu0 0.0
      %330 = vmatpush1.msra.mxu0 0.0
      %331 = vmatprep.subr.mxu0 0.0
      %332 = vmatpush1.msra.mxu0 0.0
      %333 = vmatprep.subr.mxu0 0.0
      %334 = vmatpush1.msra.mxu0 0.0
      %335 = vmatprep.subr.mxu0 0.0
      %336 = vmatpush1.msra.mxu0 0.0
      %337 = vmatprep.subr.mxu0 0.0
      %338 = vmatpush1.msra.mxu0 0.0
      %339 = vmatprep.subr.mxu0 0.0
      %340 = vmatpush1.msra.mxu0 0.0
      %341 = vmatprep.subr.mxu0 0.0
      %342 = vmatpush1.msra.mxu0 0.0
      %343 = vmatprep.subr.mxu0 0.0
      %344 = vmatpush1.msra.mxu0 0.0
      %345 = vmatprep.subr.mxu0 0.0
      %346 = vmatpush1.msra.mxu0 0.0
      %347 = vmatprep.subr.mxu0 0.0
      %348 = vmatpush1.msra.mxu0 0.0
      %349 = vmatprep.subr.mxu0 0.0
      %350 = vmatpush1.msra.mxu0 0.0
      %351 = vmatprep.subr.mxu0 0.0
      %352 = vmatpush1.msra.mxu0 0.0
      %353 = vmatprep.subr.mxu0 0.0
      %354 = vmatpush1.msra.mxu0 0.0
      %355 = vmatprep.subr.mxu0 0.0
      %356 = vmatpush1.msra.mxu0 0.0
      %357 = vmatprep.subr.mxu0 0.0
      %358 = vmatpush1.msra.mxu0 0.0
      %359 = vmatprep.subr.mxu0 0.0
      %360 = vmatpush1.msra.mxu0 0.0
      %361 = vmatprep.subr.mxu0 0.0
      %362 = vmatpush1.msra.mxu0 0.0
      %363 = vmatprep.subr.mxu0 0.0
      %364 = vmatpush1.msra.mxu0 0.0
      %365 = vmatprep.subr.mxu0 0.0
      %366 = vmatpush1.msra.mxu0 0.0
      %367 = vmatprep.subr.mxu0 0.0
      %368 = vmatpush1.msra.mxu0 0.0
      %369 = vmatprep.subr.mxu0 0.0
      %370 = vmatpush1.msra.mxu0 0.0
      %371 = vmatprep.mubr.f32.mxu0 0.0
      %372 = vmatmul.mubr.f32.gmra.mrb[0].mxu0 %v305
      %v373 = vpop.f32.mrb[0].mxu0
      %v374 = vadd.f32 %v302, %v373
      %v375 = vpop.f32.mrb[0].mxu0
      %376 = vdwg.mxu0
      %v377 = vld [vmem:[%s4] sm:$0xff]
      %v378 = vld [vmem:[%s4 + $0x8] sm:$0xff]
      %v379 = vld [vmem:[%s4 + $0x10] sm:$0xff]
      %v380 = vld [vmem:[%s4 + $0x18] sm:$0xff]
      %v381 = vld [vmem:[%s4 + $0x20] sm:$0xff]
      %v382 = vld [vmem:[%s4 + $0x28] sm:$0xff]
      %v383 = vld [vmem:[%s4 + $0x30] sm:$0xff]
      %v384 = vld [vmem:[%s4 + $0x38] sm:$0xff]
      %v385 = vld [vmem:[%s5] sm:$0xff]
      %v386 = vld [vmem:[%s5 + $0x8] sm:$0xff]
      %v387 = vld [vmem:[%s5 + $0x10] sm:$0xff]
      %v388 = vld [vmem:[%s5 + $0x18] sm:$0xff]
      %v389 = vld [vmem:[%s5 + $0x20] sm:$0xff]
      %v390 = vld [vmem:[%s5 + $0x28] sm:$0xff]
      %v391 = vld [vmem:[%s5 + $0x30] sm:$0xff]
      %v392 = vld [vmem:[%s5 + $0x38] sm:$0xff]
      %vm393 = vcmask 64512
      %v395 = vsel %vm393, %v377, 0
      %v398 = vsel %vm393, %v378, 0
      %v401 = vsel %vm393, %v379, 0
      %v404 = vsel %vm393, %v380, 0
      %v407 = vsel %vm393, %v381, 0
      %v410 = vsel %vm393, %v382, 0
      %v413 = vsel %vm393, %v383, 0
      %v416 = vsel %vm393, %v384, 0
      %418 = vmatprep.subr.mxu0 0.0
      %419 = vmatpush1.msra.mxu0 %v374
      %420 = vmatprep.subr.mxu0 0.0
      %421 = vmatpush1.msra.mxu0 0.0
      %422 = vmatprep.subr.mxu0 0.0
      %423 = vmatpush1.msra.mxu0 0.0
      %424 = vmatprep.subr.mxu0 0.0
      %425 = vmatpush1.msra.mxu0 0.0
      %426 = vmatprep.subr.mxu0 0.0
      %427 = vmatpush1.msra.mxu0 0.0
      %428 = vmatprep.subr.mxu0 0.0
      %429 = vmatpush1.msra.mxu0 0.0
      %430 = vmatprep.subr.mxu0 0.0
      %431 = vmatpush1.msra.mxu0 0.0
      %432 = vmatprep.subr.mxu0 0.0
      %433 = vmatpush1.msra.mxu0 0.0
      %434 = vmatprep.subr.mxu0 0.0
      %435 = vmatpush1.msra.mxu0 0.0
      %436 = vmatprep.subr.mxu0 0.0
      %437 = vmatpush1.msra.mxu0 0.0
      %438 = vmatprep.subr.mxu0 0.0
      %439 = vmatpush1.msra.mxu0 0.0
      %440 = vmatprep.subr.mxu0 0.0
      %441 = vmatpush1.msra.mxu0 0.0
      %442 = vmatprep.subr.mxu0 0.0
      %443 = vmatpush1.msra.mxu0 0.0
      %444 = vmatprep.subr.mxu0 0.0
      %445 = vmatpush1.msra.mxu0 0.0
      %446 = vmatprep.subr.mxu0 0.0
      %447 = vmatpush1.msra.mxu0 0.0
      %448 = vmatprep.subr.mxu0 0.0
      %449 = vmatpush1.msra.mxu0 0.0
      %450 = vmatprep.subr.mxu0 0.0
      %451 = vmatpush1.msra.mxu0 0.0
      %452 = vmatprep.subr.mxu0 0.0
      %453 = vmatpush1.msra.mxu0 0.0
      %454 = vmatprep.subr.mxu0 0.0
      %455 = vmatpush1.msra.mxu0 0.0
      %456 = vmatprep.subr.mxu0 0.0
      %457 = vmatpush1.msra.mxu0 0.0
      %458 = vmatprep.subr.mxu0 0.0
      %459 = vmatpush1.msra.mxu0 0.0
      %460 = vmatprep.subr.mxu0 0.0
      %461 = vmatpush1.msra.mxu0 0.0
      %462 = vmatprep.subr.mxu0 0.0
      %463 = vmatpush1.msra.mxu0 0.0
      %464 = vmatprep.subr.mxu0 0.0
      %465 = vmatpush1.msra.mxu0 0.0
      %466 = vmatprep.subr.mxu0 0.0
      %467 = vmatpush1.msra.mxu0 0.0
      %468 = vmatprep.subr.mxu0 0.0
      %469 = vmatpush1.msra.mxu0 0.0
      %470 = vmatprep.subr.mxu0 0.0
      %471 = vmatpush1.msra.mxu0 0.0
      %472 = vmatprep.subr.mxu0 0.0
      %473 = vmatpush1.msra.mxu0 0.0
      %474 = vmatprep.subr.mxu0 0.0
      %475 = vmatpush1.msra.mxu0 0.0
      %476 = vmatprep.subr.mxu0 0.0
      %477 = vmatpush1.msra.mxu0 0.0
      %478 = vmatprep.subr.mxu0 0.0
      %479 = vmatpush1.msra.mxu0 0.0
      %480 = vmatprep.subr.mxu0 0.0
      %481 = vmatpush1.msra.mxu0 0.0
      %482 = vmatprep.mubr.f32.mxu0 0.0
      %483 = vmatmul.mubr.f32.gmra.mrb[0].mxu0 %v395
      %v484 = vpop.f32.mrb[0].mxu0
      %v485 = vadd.f32 %v385, %v484
      %v486 = vpop.f32.mrb[0].mxu0
      %487 = vmatprep.mubr.f32.mxu0 0.0
      %488 = vmatmul.mubr.f32.gmra.mrb[0].mxu0 %v398
      %v489 = vpop.f32.mrb[0].mxu0
      %v490 = vadd.f32 %v386, %v489
      %v491 = vpop.f32.mrb[0].mxu0
      %492 = vmatprep.mubr.f32.mxu0 0.0
      %493 = vmatmul.mubr.f32.gmra.mrb[0].mxu0 %v401
      %v494 = vpop.f32.mrb[0].mxu0
      %v495 = vadd.f32 %v387, %v494
      %v496 = vpop.f32.mrb[0].mxu0
      %497 = vmatprep.mubr.f32.mxu0 0.0
      %498 = vmatmul.mubr.f32.gmra.mrb[0].mxu0 %v404
      %v499 = vpop.f32.mrb[0].mxu0
      %v500 = vadd.f32 %v388, %v499
      %v501 = vpop.f32.mrb[0].mxu0
      %502 = vmatprep.mubr.f32.mxu0 0.0
      %503 = vmatmul.mubr.f32.gmra.mrb[0].mxu0 %v407
      %v504 = vpop.f32.mrb[0].mxu0
      %v505 = vadd.f32 %v389, %v504
      %v506 = vpop.f32.mrb[0].mxu0
      %507 = vmatprep.mubr.f32.mxu0 0.0
      %508 = vmatmul.mubr.f32.gmra.mrb[0].mxu0 %v410
      %v509 = vpop.f32.mrb[0].mxu0
      %v510 = vadd.f32 %v390, %v509
      %v511 = vpop.f32.mrb[0].mxu0
      %512 = vmatprep.mubr.f32.mxu0 0.0
      %513 = vmatmul.mubr.f32.gmra.mrb[0].mxu0 %v413
      %v514 = vpop.f32.mrb[0].mxu0
      %v515 = vadd.f32 %v391, %v514
      %v516 = vpop.f32.mrb[0].mxu0
      %517 = vmatprep.mubr.f32.mxu0 0.0
      %518 = vmatmul.mubr.f32.gmra.mrb[0].mxu0 %v416
      %v519 = vpop.f32.mrb[0].mxu0
      %v520 = vadd.f32 %v392, %v519
      %v521 = vpop.f32.mrb[0].mxu0
      %522 = vdwg.mxu0
      %v523 = vmax.f32 %v485, %v505
      %v524 = vmax.f32 %v490, %v510
      %v525 = vmax.f32 %v495, %v515
      %v526 = vmax.f32 %v500, %v520
      %v527 = vsub.f32 %v485, %v523
      %v528 = vsub.f32 %v490, %v524
      %v529 = vsub.f32 %v495, %v525
      %v530 = vsub.f32 %v500, %v526
      %v531 = vmul.f32 %v527, 1.442695
      %v532 = vpow.pop %v531
      %v533 = vmul.f32 %v528, 1.442695
      %v534 = vpow.pop %v533
      %v535 = vmul.f32 %v529, 1.442695
      %v536 = vpow.pop %v535
      %v537 = vmul.f32 %v530, 1.442695
      %v538 = vpow.pop %v537
      %v539 = vsub.f32 %v505, %v523
      %v540 = vsub.f32 %v510, %v524
      %v541 = vsub.f32 %v515, %v525
      %v542 = vsub.f32 %v520, %v526
      %v543 = vmul.f32 %v539, 1.442695
      %v544 = vpow.pop %v543
      %v545 = vmul.f32 %v540, 1.442695
      %v546 = vpow.pop %v545
      %v547 = vmul.f32 %v541, 1.442695
      %v548 = vpow.pop %v547
      %v549 = vmul.f32 %v542, 1.442695
      %v550 = vpow.pop %v549
      %v551 = vadd.f32 %v532, %v544
      %v552 = vadd.f32 %v534, %v546
      %v553 = vadd.f32 %v536, %v548
      %v554 = vadd.f32 %v538, %v550
      %v555 = vrcp.pop %v551
      %v556 = vrcp.pop %v552
      %v557 = vrcp.pop %v553
      %v558 = vrcp.pop %v554
      %v559 = vmul.f32 %v532, %v555
      %v560 = vmul.f32 %v534, %v556
      %v561 = vmul.f32 %v536, %v557
      %v562 = vmul.f32 %v538, %v558
      %564 = vset.pattern.permute.xlu0 0
      %565 = vperm.xlu0 %564, %v559
      %v566 = vpop.permute.xlu0 %565
      %569 = vset.pattern.permute.xlu0 0
      %570 = vperm.xlu0 %569, %v560
      %v571 = vpop.permute.xlu0 %570
      %574 = vset.pattern.permute.xlu0 0
      %575 = vperm.xlu0 %574, %v561
      %v576 = vpop.permute.xlu0 %575
      %579 = vset.pattern.permute.xlu0 0
      %580 = vperm.xlu0 %579, %v562
      %v581 = vpop.permute.xlu0 %580
      %v583 = vmul.f32 %v566, %v272
      %v584 = vmul.f32 %v571, %v273
      %v585 = vmul.f32 %v576, %v274
      %v586 = vmul.f32 %v581, %v275
      %v587 = vmul.f32 %v544, %v555
      %v588 = vmul.f32 %v546, %v556
      %v589 = vmul.f32 %v548, %v557
      %v590 = vmul.f32 %v550, %v558
      %592 = vset.pattern.permute.xlu0 0
      %593 = vperm.xlu0 %592, %v587
      %v594 = vpop.permute.xlu0 %593
      %597 = vset.pattern.permute.xlu0 0
      %598 = vperm.xlu0 %597, %v588
      %v599 = vpop.permute.xlu0 %598
      %602 = vset.pattern.permute.xlu0 0
      %603 = vperm.xlu0 %602, %v589
      %v604 = vpop.permute.xlu0 %603
      %607 = vset.pattern.permute.xlu0 0
      %608 = vperm.xlu0 %607, %v590
      %v609 = vpop.permute.xlu0 %608
      %v611 = vmul.f32 %v594, %v276
      %v612 = vmul.f32 %v599, %v277
      %v613 = vmul.f32 %v604, %v278
      %v614 = vmul.f32 %v609, %v279
      %v615 = vadd.f32 %v583, %v611
      %v616 = vadd.f32 %v584, %v612
      %v617 = vadd.f32 %v585, %v613
      %v618 = vadd.f32 %v586, %v614
      %619 = vst.msk [vmem:[%s271] sm:$0xff] %vm284, %v615
      %620 = vst.msk [vmem:[%s271 + $0x8] sm:$0xff] %vm284, %v616
      %621 = vst.msk [vmem:[%s271 + $0x10] sm:$0xff] %vm284, %v617
      %622 = vst.msk [vmem:[%s271 + $0x18] sm:$0xff] %vm284, %v618
      %p623 = scmp.lt.s32.totalorder %s17, 1
      %s624 = scalar_select %p623, %s17, 1
      %s625 = smul.addr %s624, 4
      %s626 = smul.addr %s625, 8
      %s627 = scalar_lea.vmem %s6, %s626
      // Predicated region
      $region45: #{ss_forward_pallas.1} parent=43 // pred_check
        %p628 = pneg %p171
      $region46: #{ss_forward_pallas.1} parent=43 // pred_check_branch
        %630 = sbr.rel (%p628) target = $region48
      $region47: #{ss_forward_pallas.1} parent=43 // pred_region
        _
      $region48: #{ss_forward_pallas.1} parent=43 // pred_fallthru
        _
    $region44: #{ss_forward_pallas.1} parent=5 // pred_fallthru
      _
    %p631 = scmp.le.s32.totalorder 2, %s12
    // Predicated region
    $region49: #{ss_forward_pallas.1} parent=5 // pred_check
      %p632 = pneg %p631
    $region50: #{ss_forward_pallas.1} parent=5 // pred_check_branch
      %634 = sbr.rel (%p632) target = $region52
    $region51: #{ss_forward_pallas.1} parent=5 // pred_region
      %s635 = ssub.s32 %s12, 2
      // Predicated region
      $region53: #{ss_forward_pallas.1} parent=51 // pred_check
        %p636 = pneg %p177
      $region54: #{ss_forward_pallas.1} parent=51 // pred_check_branch
        %638 = sbr.rel (%p636) target = $region56
      $region55: #{ss_forward_pallas.1} parent=51 // pred_region
        %p639 = scmp.lt.s32.totalorder %s18, 1
        %s640 = scalar_select %p639, %s18, 1
        %s641 = smul.addr %s640, 4
        %s642 = smul.addr %s641, 8
        %s643 = scalar_lea.vmem %s6, %s642
      $region56: #{ss_forward_pallas.1} parent=51 // pred_fallthru
        _
    $region52: #{ss_forward_pallas.1} parent=5 // pred_fallthru
      _
  $region6: #{ss_forward_pallas.1} parent=0 // loop_footer
    %s16 = sadd.s32 1, %s12
  $region7: #{ss_forward_pallas.1} parent=0 // loop_footer_branch
    %11 = sbr.rel target = $region3
  $region8: #{ss_forward_pallas.1} parent=0 // loop_exit
    _

</llo_original>
